<compile_context>
chip_gen: v5e
topology: v5e:2x2
jax: 0.10.0
libtpu: 0.0.40
codegen_flags: <defaults>
</compile_context>

<pallas_src>
import functools

import jax
import jax.numpy as jnp
from jax.experimental import pallas as pl
from jax.experimental.pallas import tpu as pltpu

D_IN = 100       # feature dim, pinned by nn.Linear(100, 100) in the module
D_PAD = 128      # lane-padded feature dim used inside the kernel
ALPHA = 0.2      # LeakyReLU negative slope
NEG_BIG = -9e15  # same masking constant as the PyTorch code


def _round_up(x, m):
    return ((x + m - 1) // m) * m


def _vmem_capacity_bytes():
    try:
        return int(pltpu.get_tpu_info().vmem_capacity_bytes)
    except Exception:
        return 64 << 20  # conservative fallback: assume v7x-sized VMEM


def _pick_tile_n(n_items, n_neighbors):
    """K-aware tile size from a per-step VMEM budget (review items 3-5)."""
    budget = int(_vmem_capacity_bytes() * 0.45)
    K = n_neighbors
    per_n = (2 * (2 * K * D_PAD * 2      # ent + rel, bf16, double-buffered
                  + D_PAD * 2            # item, bf16, double-buffered
                  + K * 4)               # mask bias, f32, double-buffered
             + 2 * D_PAD * 4             # output, f32, double-buffered
             + 10 * D_PAD * 4)           # in-kernel f32 temps headroom
    tile_n = budget // per_n
    # >= 4 grid steps so both v7x TensorCores keep their input DMAs pipelined.
    tile_n = min(tile_n, _round_up(-(-n_items // 4), 8), 2048)
    tile_n = max(8, tile_n)
    if tile_n >= 16:
        tile_n = (tile_n // 16) * 16     # bf16 minor-dim tiling is (16, 128)
    return int(tile_n)


def _gat_kernel(item_ref, ent_ref, rel_ref, mask_ref, w_ref, b_ref, out_ref,
                *, alpha, n_neighbors):
    # item_ref: (tn, Dp) bf16          ent_ref/rel_ref: (K, tn, Dp) bf16
    # mask_ref: (tn, K) f32            w_ref: (Dp, Dp) bf16   b_ref: (1, Dp) f32
    # out_ref:  (tn, Dp) f32
    K = n_neighbors

    def we_k(k):
        # Recomputed per use (VPU slack in an HBM-bound kernel) so no
        # (tn, K, 128) f32 temporary is ever materialized.
        return ent_ref[k].astype(jnp.float32) * rel_ref[k].astype(jnp.float32)

    maskv = mask_ref[...]                                    # additive adjacency bias

    # Pass 1: per-neighbor attention logits, kept as K separate (tn, 1) columns
    # (no narrow (tn, K) reductions / lane-masked stores needed).
    # NOTE: the per-k lane reduce runs on the XLU; if a v7x bundle dump shows
    # the XLU as the binding slot it can be moved to the MXU via a ones-vector
    # dot, but on v5e/v6e the kernel stays HBM-bound.
    logits = []
    for k in range(K):
        e_k = jnp.sum(we_k(k), axis=-1, keepdims=True)       # (tn, 1)
        e_k = jnp.where(e_k > 0, e_k, alpha * e_k)            # LeakyReLU(alpha)
        logits.append(e_k + maskv[:, k:k + 1])

    # Numerically-stable softmax across the K columns.
    m = logits[0]
    for k in range(1, K):
        m = jnp.maximum(m, logits[k])
    ps = [jnp.exp(l - m) for l in logits]
    denom = ps[0]
    for k in range(1, K):
        denom = denom + ps[k]
    inv = pl.reciprocal(denom, approx=True)                   # EUP slot, ~free

    # Pass 2: h'[n,:] = (sum_k p_k[n] * we_k[n,:]) / denom[n]  (recompute we_k).
    h = ps[0] * we_k(0)
    for k in range(1, K):
        h = h + ps[k] * we_k(k)
    h = h * inv                                                # (tn, Dp) f32

    # Out-projection (bf16 MXU feed, f32 accumulate) + bias + item residual.
    out = jnp.dot(h.astype(jnp.bfloat16), w_ref[...],
                  preferred_element_type=jnp.float32)
    out = out + b_ref[...] + item_ref[...].astype(jnp.float32)
    out_ref[...] = out.astype(out_ref.dtype)


def gat_forward_relation(item_embs, entity_embs, relations, adj, w_out, b_out,
                         *, tile_n=None, alpha=ALPHA):
    """item_embs (N,100) f32, entity_embs/relations (N,K,100), adj (N,K),
    w_out (100,100) stored as (in,out), b_out (1,100)."""
    N, K, Dd = entity_embs.shape
    assert Dd == D_IN and item_embs.shape == (N, D_IN)
    assert relations.shape == (N, K, D_IN) and adj.shape == (N, K)
    assert w_out.shape == (D_IN, D_IN) and b_out.shape == (1, D_IN)

    if tile_n is None:
        tile_n = _pick_tile_n(N, K)
    else:
        tile_n = max(8, (int(tile_n) // 8) * 8)

    n_pad = _round_up(N, tile_n)
    pad_n = n_pad - N
    dpad = D_PAD - D_IN

    # item: bf16, lane-padded 100 -> 128 (zero padding is exact end to end).
    item_p = jnp.pad(item_embs, ((0, pad_n), (0, dpad))).astype(jnp.bfloat16)

    # entity/relations: neighbor-major (K, N, Dp) so each grid block is
    # (K, tile_n, 128) bf16 with tile-aligned minor dims (no sublane padding),
    # and ent_ref[k] / rel_ref[k] are clean (tile_n, 128) loads in-kernel.
    ent_p = jnp.pad(jnp.transpose(entity_embs, (1, 0, 2)),
                    ((0, 0), (0, pad_n), (0, dpad))).astype(jnp.bfloat16)
    rel_p = jnp.pad(jnp.transpose(relations, (1, 0, 2)),
                    ((0, 0), (0, pad_n), (0, dpad))).astype(jnp.bfloat16)

    # Additive adjacency mask bias (f32).  Padded rows (zero bias, zero
    # features) produce finite values and are sliced off below.
    mask_bias = jnp.where(adj > 0, 0.0, NEG_BIG).astype(jnp.float32)
    mask_bias = jnp.pad(mask_bias, ((0, pad_n), (0, 0)))

    # W pre-cast to bf16 (resident across the grid), bias stays f32.
    w_p = jnp.pad(w_out, ((0, dpad), (0, dpad))).astype(jnp.bfloat16)
    b_p = jnp.pad(b_out.astype(jnp.float32), ((0, 0), (0, dpad)))

    kernel = functools.partial(_gat_kernel, alpha=alpha, n_neighbors=K)
    out = pl.pallas_call(
        kernel,
        out_shape=jax.ShapeDtypeStruct((n_pad, D_PAD), jnp.float32),
        grid_spec=pltpu.PrefetchScalarGridSpec(
            num_scalar_prefetch=0,
            grid=(n_pad // tile_n,),
            in_specs=[
                pl.BlockSpec((tile_n, D_PAD), lambda i: (i, 0)),        # item
                pl.BlockSpec((K, tile_n, D_PAD), lambda i: (0, i, 0)),  # entity
                pl.BlockSpec((K, tile_n, D_PAD), lambda i: (0, i, 0)),  # relations
                pl.BlockSpec((tile_n, K), lambda i: (i, 0)),            # mask bias
                pl.BlockSpec((D_PAD, D_PAD), lambda i: (0, 0)),         # W_out
                pl.BlockSpec((1, D_PAD), lambda i: (0, 0)),             # b_out
            ],
            out_specs=pl.BlockSpec((tile_n, D_PAD), lambda i: (i, 0)),
        ),
        compiler_params=pltpu.CompilerParams(
            dimension_semantics=("parallel",),
            vmem_limit_bytes=int(min(_vmem_capacity_bytes() * 3 // 4, 96 << 20))),
    )(item_p, ent_p, rel_p, mask_bias, w_p, b_p)

    return out[:N, :D_IN]


def gat_reference(item_embs, entity_embs, relations, adj, w_out, b_out,
                  alpha=ALPHA):
    """Pure-JAX f32 reference of the same forward path."""
    we = entity_embs * relations
    e_in = jnp.sum(we, axis=-1)
    e = jnp.where(e_in > 0, e_in, alpha * e_in)
    masked = jnp.where(adj > 0, e, NEG_BIG)
    att = jax.nn.softmax(masked, axis=1)
    h_prime = jnp.sum(att[:, :, None] * we, axis=1)
    return h_prime @ w_out + b_out[0] + item_embs


if __name__ == "__main__":
    key = jax.random.PRNGKey(0)
    k_item, k_ent, k_rel, k_adj, k_w, k_b = jax.random.split(key, 6)

    N, K = 16, 8  # 16 items, 8 neighbors each; feature dim D = 100 (fixed)

    item_embs = jax.random.normal(k_item, (N, D_IN), dtype=jnp.float32)
    entity_embs = jax.random.normal(k_ent, (N, K, D_IN), dtype=jnp.float32)
    relations = jax.random.normal(k_rel, (N, K, D_IN), dtype=jnp.float32)
    adj = (jax.random.uniform(k_adj, (N, K)) > 0.3).astype(jnp.float32)

    # GAT.out = nn.Linear(100, 100); deterministic synthetic init
    # (stored as (in, out) so the kernel computes x @ W + b).
    w_out = jax.random.normal(k_w, (D_IN, D_IN), dtype=jnp.float32) / jnp.sqrt(D_IN)
    b_out = jax.random.normal(k_b, (1, D_IN), dtype=jnp.float32) * 0.01

    # TODO(synk): GraphAttentionLayer.forward is shape-inconsistent in PyTorch;
    # forward_relation is the effective forward and is what runs here.
    out = gat_forward_relation(item_embs, entity_embs, relations, adj,
                               w_out, b_out)
    out = jax.block_until_ready(out)

    def bf16_round(x):
        return x.astype(jnp.bfloat16).astype(jnp.float32)

    # Tight check against a reference that matches the kernel's bf16 rounding
    # of item/entity/relation inputs (remaining diff: approx reciprocal + bf16
    # MXU feed of h/W + reduction order).
    ref_matched = gat_reference(bf16_round(item_embs), bf16_round(entity_embs),
                                bf16_round(relations), adj, w_out, b_out)
    assert jnp.allclose(out, ref_matched, atol=2e-2, rtol=2e-2), \
        "mismatch vs bf16-matched reference"

    # Loose check against the full-f32 reference (bf16 input storage drifts
    # the softmax logits slightly).
    ref_f32 = gat_reference(item_embs, entity_embs, relations, adj, w_out, b_out)
    assert jnp.allclose(out, ref_f32, atol=2e-1, rtol=5e-2), \
        "mismatch vs f32 reference"

    print("KERNEL_OK")
</pallas_src>

<mosaic_0001>
module attributes {stable_mosaic.version = 11 : i64} {
  func.func @_gat_kernel(%arg0: i32, %arg1: memref<8x128xbf16, #tpu.memory_space<vmem>>, %arg2: memref<8x8x128xbf16, #tpu.memory_space<vmem>>, %arg3: memref<8x8x128xbf16, #tpu.memory_space<vmem>>, %arg4: memref<8x8xf32, #tpu.memory_space<vmem>>, %arg5: memref<128x128xbf16, #tpu.memory_space<vmem>>, %arg6: memref<1x128xf32, #tpu.memory_space<vmem>>, %arg7: memref<8x128xf32, #tpu.memory_space<vmem>>) attributes {dimension_semantics = [#tpu.dimension_semantics<parallel>], iteration_bounds = array<i64: 2>, scalar_prefetch = 0 : i64, scratch_operands = 0 : i64, tpu.core_type = #tpu.core_type<tc>, window_params = [{transform_indices = @transform_0, window_bounds = array<i64: 8, 128>}, {transform_indices = @transform_1, window_bounds = array<i64: 8, 8, 128>}, {transform_indices = @transform_2, window_bounds = array<i64: 8, 8, 128>}, {transform_indices = @transform_3, window_bounds = array<i64: 8, 8>}, {pipeline_mode = #tpu.pipeline_mode<synchronous>, transform_indices = @transform_4, window_bounds = array<i64: 128, 128>}, {pipeline_mode = #tpu.pipeline_mode<synchronous>, transform_indices = @transform_5, window_bounds = array<i64: 1, 128>}, {transform_indices = @transform_6, window_bounds = array<i64: 8, 128>}]} {
    %c0 = arith.constant 0 : index
    %c0_0 = arith.constant 0 : index
    %0 = vector.load %arg4[%c0, %c0_0] : memref<8x8xf32, #tpu.memory_space<vmem>>, vector<8x8xf32>
    %c0_1 = arith.constant 0 : index
    %c0_2 = arith.constant 0 : index
    %c0_3 = arith.constant 0 : index
    %1 = vector.load %arg2[%c0_1, %c0_2, %c0_3] : memref<8x8x128xbf16, #tpu.memory_space<vmem>>, vector<1x8x128xbf16>
    %2 = vector.shape_cast %1 : vector<1x8x128xbf16> to vector<8x128xbf16>
    %3 = arith.extf %2 : vector<8x128xbf16> to vector<8x128xf32>
    %c0_4 = arith.constant 0 : index
    %c0_5 = arith.constant 0 : index
    %c0_6 = arith.constant 0 : index
    %4 = vector.load %arg3[%c0_4, %c0_5, %c0_6] : memref<8x8x128xbf16, #tpu.memory_space<vmem>>, vector<1x8x128xbf16>
    %5 = vector.shape_cast %4 : vector<1x8x128xbf16> to vector<8x128xbf16>
    %6 = arith.extf %5 : vector<8x128xbf16> to vector<8x128xf32>
    %7 = arith.mulf %3, %6 : vector<8x128xf32>
    %cst = arith.constant dense<0.000000e+00> : vector<8xf32>
    %8 = vector.multi_reduction <add>, %7, %cst [1] : vector<8x128xf32> to vector<8xf32>
    %9 = vector.shape_cast %8 : vector<8xf32> to vector<8x1xf32>
    %cst_7 = arith.constant 0.000000e+00 : f32
    %10 = vector.broadcast %cst_7 : f32 to vector<8x1xf32>
    %11 = arith.cmpf ogt, %9, %10 : vector<8x1xf32>
    %cst_8 = arith.constant 2.000000e-01 : f32
    %12 = vector.broadcast %cst_8 : f32 to vector<8x1xf32>
    %13 = arith.mulf %12, %9 : vector<8x1xf32>
    %14 = arith.select %11, %9, %13 : vector<8x1xi1>, vector<8x1xf32>
    %15 = vector.extract_strided_slice %0 {offsets = [0, 0], sizes = [8, 1], strides = [1, 1]} : vector<8x8xf32> to vector<8x1xf32>
    %16 = arith.addf %14, %15 : vector<8x1xf32>
    %c1 = arith.constant 1 : index
    %c0_9 = arith.constant 0 : index
    %c0_10 = arith.constant 0 : index
    %17 = vector.load %arg2[%c1, %c0_9, %c0_10] : memref<8x8x128xbf16, #tpu.memory_space<vmem>>, vector<1x8x128xbf16>
    %18 = vector.shape_cast %17 : vector<1x8x128xbf16> to vector<8x128xbf16>
    %19 = arith.extf %18 : vector<8x128xbf16> to vector<8x128xf32>
    %c1_11 = arith.constant 1 : index
    %c0_12 = arith.constant 0 : index
    %c0_13 = arith.constant 0 : index
    %20 = vector.load %arg3[%c1_11, %c0_12, %c0_13] : memref<8x8x128xbf16, #tpu.memory_space<vmem>>, vector<1x8x128xbf16>
    %21 = vector.shape_cast %20 : vector<1x8x128xbf16> to vector<8x128xbf16>
    %22 = arith.extf %21 : vector<8x128xbf16> to vector<8x128xf32>
    %23 = arith.mulf %19, %22 : vector<8x128xf32>
    %cst_14 = arith.constant dense<0.000000e+00> : vector<8xf32>
    %24 = vector.multi_reduction <add>, %23, %cst_14 [1] : vector<8x128xf32> to vector<8xf32>
    %25 = vector.shape_cast %24 : vector<8xf32> to vector<8x1xf32>
    %cst_15 = arith.constant 0.000000e+00 : f32
    %26 = vector.broadcast %cst_15 : f32 to vector<8x1xf32>
    %27 = arith.cmpf ogt, %25, %26 : vector<8x1xf32>
    %cst_16 = arith.constant 2.000000e-01 : f32
    %28 = vector.broadcast %cst_16 : f32 to vector<8x1xf32>
    %29 = arith.mulf %28, %25 : vector<8x1xf32>
    %30 = arith.select %27, %25, %29 : vector<8x1xi1>, vector<8x1xf32>
    %31 = vector.extract_strided_slice %0 {offsets = [0, 1], sizes = [8, 1], strides = [1, 1]} : vector<8x8xf32> to vector<8x1xf32>
    %32 = arith.addf %30, %31 : vector<8x1xf32>
    %c2 = arith.constant 2 : index
    %c0_17 = arith.constant 0 : index
    %c0_18 = arith.constant 0 : index
    %33 = vector.load %arg2[%c2, %c0_17, %c0_18] : memref<8x8x128xbf16, #tpu.memory_space<vmem>>, vector<1x8x128xbf16>
    %34 = vector.shape_cast %33 : vector<1x8x128xbf16> to vector<8x128xbf16>
    %35 = arith.extf %34 : vector<8x128xbf16> to vector<8x128xf32>
    %c2_19 = arith.constant 2 : index
    %c0_20 = arith.constant 0 : index
    %c0_21 = arith.constant 0 : index
    %36 = vector.load %arg3[%c2_19, %c0_20, %c0_21] : memref<8x8x128xbf16, #tpu.memory_space<vmem>>, vector<1x8x128xbf16>
    %37 = vector.shape_cast %36 : vector<1x8x128xbf16> to vector<8x128xbf16>
    %38 = arith.extf %37 : vector<8x128xbf16> to vector<8x128xf32>
    %39 = arith.mulf %35, %38 : vector<8x128xf32>
    %cst_22 = arith.constant dense<0.000000e+00> : vector<8xf32>
    %40 = vector.multi_reduction <add>, %39, %cst_22 [1] : vector<8x128xf32> to vector<8xf32>
    %41 = vector.shape_cast %40 : vector<8xf32> to vector<8x1xf32>
    %cst_23 = arith.constant 0.000000e+00 : f32
    %42 = vector.broadcast %cst_23 : f32 to vector<8x1xf32>
    %43 = arith.cmpf ogt, %41, %42 : vector<8x1xf32>
    %cst_24 = arith.constant 2.000000e-01 : f32
    %44 = vector.broadcast %cst_24 : f32 to vector<8x1xf32>
    %45 = arith.mulf %44, %41 : vector<8x1xf32>
    %46 = arith.select %43, %41, %45 : vector<8x1xi1>, vector<8x1xf32>
    %47 = vector.extract_strided_slice %0 {offsets = [0, 2], sizes = [8, 1], strides = [1, 1]} : vector<8x8xf32> to vector<8x1xf32>
    %48 = arith.addf %46, %47 : vector<8x1xf32>
    %c3 = arith.constant 3 : index
    %c0_25 = arith.constant 0 : index
    %c0_26 = arith.constant 0 : index
    %49 = vector.load %arg2[%c3, %c0_25, %c0_26] : memref<8x8x128xbf16, #tpu.memory_space<vmem>>, vector<1x8x128xbf16>
    %50 = vector.shape_cast %49 : vector<1x8x128xbf16> to vector<8x128xbf16>
    %51 = arith.extf %50 : vector<8x128xbf16> to vector<8x128xf32>
    %c3_27 = arith.constant 3 : index
    %c0_28 = arith.constant 0 : index
    %c0_29 = arith.constant 0 : index
    %52 = vector.load %arg3[%c3_27, %c0_28, %c0_29] : memref<8x8x128xbf16, #tpu.memory_space<vmem>>, vector<1x8x128xbf16>
    %53 = vector.shape_cast %52 : vector<1x8x128xbf16> to vector<8x128xbf16>
    %54 = arith.extf %53 : vector<8x128xbf16> to vector<8x128xf32>
    %55 = arith.mulf %51, %54 : vector<8x128xf32>
    %cst_30 = arith.constant dense<0.000000e+00> : vector<8xf32>
    %56 = vector.multi_reduction <add>, %55, %cst_30 [1] : vector<8x128xf32> to vector<8xf32>
    %57 = vector.shape_cast %56 : vector<8xf32> to vector<8x1xf32>
    %cst_31 = arith.constant 0.000000e+00 : f32
    %58 = vector.broadcast %cst_31 : f32 to vector<8x1xf32>
    %59 = arith.cmpf ogt, %57, %58 : vector<8x1xf32>
    %cst_32 = arith.constant 2.000000e-01 : f32
    %60 = vector.broadcast %cst_32 : f32 to vector<8x1xf32>
    %61 = arith.mulf %60, %57 : vector<8x1xf32>
    %62 = arith.select %59, %57, %61 : vector<8x1xi1>, vector<8x1xf32>
    %63 = vector.extract_strided_slice %0 {offsets = [0, 3], sizes = [8, 1], strides = [1, 1]} : vector<8x8xf32> to vector<8x1xf32>
    %64 = arith.addf %62, %63 : vector<8x1xf32>
    %c4 = arith.constant 4 : index
    %c0_33 = arith.constant 0 : index
    %c0_34 = arith.constant 0 : index
    %65 = vector.load %arg2[%c4, %c0_33, %c0_34] : memref<8x8x128xbf16, #tpu.memory_space<vmem>>, vector<1x8x128xbf16>
    %66 = vector.shape_cast %65 : vector<1x8x128xbf16> to vector<8x128xbf16>
    %67 = arith.extf %66 : vector<8x128xbf16> to vector<8x128xf32>
    %c4_35 = arith.constant 4 : index
    %c0_36 = arith.constant 0 : index
    %c0_37 = arith.constant 0 : index
    %68 = vector.load %arg3[%c4_35, %c0_36, %c0_37] : memref<8x8x128xbf16, #tpu.memory_space<vmem>>, vector<1x8x128xbf16>
    %69 = vector.shape_cast %68 : vector<1x8x128xbf16> to vector<8x128xbf16>
    %70 = arith.extf %69 : vector<8x128xbf16> to vector<8x128xf32>
    %71 = arith.mulf %67, %70 : vector<8x128xf32>
    %cst_38 = arith.constant dense<0.000000e+00> : vector<8xf32>
    %72 = vector.multi_reduction <add>, %71, %cst_38 [1] : vector<8x128xf32> to vector<8xf32>
    %73 = vector.shape_cast %72 : vector<8xf32> to vector<8x1xf32>
    %cst_39 = arith.constant 0.000000e+00 : f32
    %74 = vector.broadcast %cst_39 : f32 to vector<8x1xf32>
    %75 = arith.cmpf ogt, %73, %74 : vector<8x1xf32>
    %cst_40 = arith.constant 2.000000e-01 : f32
    %76 = vector.broadcast %cst_40 : f32 to vector<8x1xf32>
    %77 = arith.mulf %76, %73 : vector<8x1xf32>
    %78 = arith.select %75, %73, %77 : vector<8x1xi1>, vector<8x1xf32>
    %79 = vector.extract_strided_slice %0 {offsets = [0, 4], sizes = [8, 1], strides = [1, 1]} : vector<8x8xf32> to vector<8x1xf32>
    %80 = arith.addf %78, %79 : vector<8x1xf32>
    %c5 = arith.constant 5 : index
    %c0_41 = arith.constant 0 : index
    %c0_42 = arith.constant 0 : index
    %81 = vector.load %arg2[%c5, %c0_41, %c0_42] : memref<8x8x128xbf16, #tpu.memory_space<vmem>>, vector<1x8x128xbf16>
    %82 = vector.shape_cast %81 : vector<1x8x128xbf16> to vector<8x128xbf16>
    %83 = arith.extf %82 : vector<8x128xbf16> to vector<8x128xf32>
    %c5_43 = arith.constant 5 : index
    %c0_44 = arith.constant 0 : index
    %c0_45 = arith.constant 0 : index
    %84 = vector.load %arg3[%c5_43, %c0_44, %c0_45] : memref<8x8x128xbf16, #tpu.memory_space<vmem>>, vector<1x8x128xbf16>
    %85 = vector.shape_cast %84 : vector<1x8x128xbf16> to vector<8x128xbf16>
    %86 = arith.extf %85 : vector<8x128xbf16> to vector<8x128xf32>
    %87 = arith.mulf %83, %86 : vector<8x128xf32>
    %cst_46 = arith.constant dense<0.000000e+00> : vector<8xf32>
    %88 = vector.multi_reduction <add>, %87, %cst_46 [1] : vector<8x128xf32> to vector<8xf32>
    %89 = vector.shape_cast %88 : vector<8xf32> to vector<8x1xf32>
    %cst_47 = arith.constant 0.000000e+00 : f32
    %90 = vector.broadcast %cst_47 : f32 to vector<8x1xf32>
    %91 = arith.cmpf ogt, %89, %90 : vector<8x1xf32>
    %cst_48 = arith.constant 2.000000e-01 : f32
    %92 = vector.broadcast %cst_48 : f32 to vector<8x1xf32>
    %93 = arith.mulf %92, %89 : vector<8x1xf32>
    %94 = arith.select %91, %89, %93 : vector<8x1xi1>, vector<8x1xf32>
    %95 = vector.extract_strided_slice %0 {offsets = [0, 5], sizes = [8, 1], strides = [1, 1]} : vector<8x8xf32> to vector<8x1xf32>
    %96 = arith.addf %94, %95 : vector<8x1xf32>
    %c6 = arith.constant 6 : index
    %c0_49 = arith.constant 0 : index
    %c0_50 = arith.constant 0 : index
    %97 = vector.load %arg2[%c6, %c0_49, %c0_50] : memref<8x8x128xbf16, #tpu.memory_space<vmem>>, vector<1x8x128xbf16>
    %98 = vector.shape_cast %97 : vector<1x8x128xbf16> to vector<8x128xbf16>
    %99 = arith.extf %98 : vector<8x128xbf16> to vector<8x128xf32>
    %c6_51 = arith.constant 6 : index
    %c0_52 = arith.constant 0 : index
    %c0_53 = arith.constant 0 : index
    %100 = vector.load %arg3[%c6_51, %c0_52, %c0_53] : memref<8x8x128xbf16, #tpu.memory_space<vmem>>, vector<1x8x128xbf16>
    %101 = vector.shape_cast %100 : vector<1x8x128xbf16> to vector<8x128xbf16>
    %102 = arith.extf %101 : vector<8x128xbf16> to vector<8x128xf32>
    %103 = arith.mulf %99, %102 : vector<8x128xf32>
    %cst_54 = arith.constant dense<0.000000e+00> : vector<8xf32>
    %104 = vector.multi_reduction <add>, %103, %cst_54 [1] : vector<8x128xf32> to vector<8xf32>
    %105 = vector.shape_cast %104 : vector<8xf32> to vector<8x1xf32>
    %cst_55 = arith.constant 0.000000e+00 : f32
    %106 = vector.broadcast %cst_55 : f32 to vector<8x1xf32>
    %107 = arith.cmpf ogt, %105, %106 : vector<8x1xf32>
    %cst_56 = arith.constant 2.000000e-01 : f32
    %108 = vector.broadcast %cst_56 : f32 to vector<8x1xf32>
    %109 = arith.mulf %108, %105 : vector<8x1xf32>
    %110 = arith.select %107, %105, %109 : vector<8x1xi1>, vector<8x1xf32>
    %111 = vector.extract_strided_slice %0 {offsets = [0, 6], sizes = [8, 1], strides = [1, 1]} : vector<8x8xf32> to vector<8x1xf32>
    %112 = arith.addf %110, %111 : vector<8x1xf32>
    %c7 = arith.constant 7 : index
    %c0_57 = arith.constant 0 : index
    %c0_58 = arith.constant 0 : index
    %113 = vector.load %arg2[%c7, %c0_57, %c0_58] : memref<8x8x128xbf16, #tpu.memory_space<vmem>>, vector<1x8x128xbf16>
    %114 = vector.shape_cast %113 : vector<1x8x128xbf16> to vector<8x128xbf16>
    %115 = arith.extf %114 : vector<8x128xbf16> to vector<8x128xf32>
    %c7_59 = arith.constant 7 : index
    %c0_60 = arith.constant 0 : index
    %c0_61 = arith.constant 0 : index
    %116 = vector.load %arg3[%c7_59, %c0_60, %c0_61] : memref<8x8x128xbf16, #tpu.memory_space<vmem>>, vector<1x8x128xbf16>
    %117 = vector.shape_cast %116 : vector<1x8x128xbf16> to vector<8x128xbf16>
    %118 = arith.extf %117 : vector<8x128xbf16> to vector<8x128xf32>
    %119 = arith.mulf %115, %118 : vector<8x128xf32>
    %cst_62 = arith.constant dense<0.000000e+00> : vector<8xf32>
    %120 = vector.multi_reduction <add>, %119, %cst_62 [1] : vector<8x128xf32> to vector<8xf32>
    %121 = vector.shape_cast %120 : vector<8xf32> to vector<8x1xf32>
    %cst_63 = arith.constant 0.000000e+00 : f32
    %122 = vector.broadcast %cst_63 : f32 to vector<8x1xf32>
    %123 = arith.cmpf ogt, %121, %122 : vector<8x1xf32>
    %cst_64 = arith.constant 2.000000e-01 : f32
    %124 = vector.broadcast %cst_64 : f32 to vector<8x1xf32>
    %125 = arith.mulf %124, %121 : vector<8x1xf32>
    %126 = arith.select %123, %121, %125 : vector<8x1xi1>, vector<8x1xf32>
    %127 = vector.extract_strided_slice %0 {offsets = [0, 7], sizes = [8, 1], strides = [1, 1]} : vector<8x8xf32> to vector<8x1xf32>
    %128 = arith.addf %126, %127 : vector<8x1xf32>
    %129 = arith.maximumf %16, %32 : vector<8x1xf32>
    %130 = arith.maximumf %129, %48 : vector<8x1xf32>
    %131 = arith.maximumf %130, %64 : vector<8x1xf32>
    %132 = arith.maximumf %131, %80 : vector<8x1xf32>
    %133 = arith.maximumf %132, %96 : vector<8x1xf32>
    %134 = arith.maximumf %133, %112 : vector<8x1xf32>
    %135 = arith.maximumf %134, %128 : vector<8x1xf32>
    %136 = arith.subf %16, %135 : vector<8x1xf32>
    %137 = math.exp %136 : vector<8x1xf32>
    %138 = arith.subf %32, %135 : vector<8x1xf32>
    %139 = math.exp %138 : vector<8x1xf32>
    %140 = arith.subf %48, %135 : vector<8x1xf32>
    %141 = math.exp %140 : vector<8x1xf32>
    %142 = arith.subf %64, %135 : vector<8x1xf32>
    %143 = math.exp %142 : vector<8x1xf32>
    %144 = arith.subf %80, %135 : vector<8x1xf32>
    %145 = math.exp %144 : vector<8x1xf32>
    %146 = arith.subf %96, %135 : vector<8x1xf32>
    %147 = math.exp %146 : vector<8x1xf32>
    %148 = arith.subf %112, %135 : vector<8x1xf32>
    %149 = math.exp %148 : vector<8x1xf32>
    %150 = arith.subf %128, %135 : vector<8x1xf32>
    %151 = math.exp %150 : vector<8x1xf32>
    %152 = arith.addf %137, %139 : vector<8x1xf32>
    %153 = arith.addf %152, %141 : vector<8x1xf32>
    %154 = arith.addf %153, %143 : vector<8x1xf32>
    %155 = arith.addf %154, %145 : vector<8x1xf32>
    %156 = arith.addf %155, %147 : vector<8x1xf32>
    %157 = arith.addf %156, %149 : vector<8x1xf32>
    %158 = arith.addf %157, %151 : vector<8x1xf32>
    %159 = tpu.reciprocal %158 {approx = true} : vector<8x1xf32> -> vector<8x1xf32>
    %c0_65 = arith.constant 0 : index
    %c0_66 = arith.constant 0 : index
    %c0_67 = arith.constant 0 : index
    %160 = vector.load %arg2[%c0_65, %c0_66, %c0_67] : memref<8x8x128xbf16, #tpu.memory_space<vmem>>, vector<1x8x128xbf16>
    %161 = vector.shape_cast %160 : vector<1x8x128xbf16> to vector<8x128xbf16>
    %162 = arith.extf %161 : vector<8x128xbf16> to vector<8x128xf32>
    %c0_68 = arith.constant 0 : index
    %c0_69 = arith.constant 0 : index
    %c0_70 = arith.constant 0 : index
    %163 = vector.load %arg3[%c0_68, %c0_69, %c0_70] : memref<8x8x128xbf16, #tpu.memory_space<vmem>>, vector<1x8x128xbf16>
    %164 = vector.shape_cast %163 : vector<1x8x128xbf16> to vector<8x128xbf16>
    %165 = arith.extf %164 : vector<8x128xbf16> to vector<8x128xf32>
    %166 = arith.mulf %162, %165 : vector<8x128xf32>
    %167 = vector.broadcast %137 : vector<8x1xf32> to vector<8x128xf32>
    %168 = arith.mulf %167, %166 : vector<8x128xf32>
    %c1_71 = arith.constant 1 : index
    %c0_72 = arith.constant 0 : index
    %c0_73 = arith.constant 0 : index
    %169 = vector.load %arg2[%c1_71, %c0_72, %c0_73] : memref<8x8x128xbf16, #tpu.memory_space<vmem>>, vector<1x8x128xbf16>
    %170 = vector.shape_cast %169 : vector<1x8x128xbf16> to vector<8x128xbf16>
    %171 = arith.extf %170 : vector<8x128xbf16> to vector<8x128xf32>
    %c1_74 = arith.constant 1 : index
    %c0_75 = arith.constant 0 : index
    %c0_76 = arith.constant 0 : index
    %172 = vector.load %arg3[%c1_74, %c0_75, %c0_76] : memref<8x8x128xbf16, #tpu.memory_space<vmem>>, vector<1x8x128xbf16>
    %173 = vector.shape_cast %172 : vector<1x8x128xbf16> to vector<8x128xbf16>
    %174 = arith.extf %173 : vector<8x128xbf16> to vector<8x128xf32>
    %175 = arith.mulf %171, %174 : vector<8x128xf32>
    %176 = vector.broadcast %139 : vector<8x1xf32> to vector<8x128xf32>
    %177 = arith.mulf %176, %175 : vector<8x128xf32>
    %178 = arith.addf %168, %177 : vector<8x128xf32>
    %c2_77 = arith.constant 2 : index
    %c0_78 = arith.constant 0 : index
    %c0_79 = arith.constant 0 : index
    %179 = vector.load %arg2[%c2_77, %c0_78, %c0_79] : memref<8x8x128xbf16, #tpu.memory_space<vmem>>, vector<1x8x128xbf16>
    %180 = vector.shape_cast %179 : vector<1x8x128xbf16> to vector<8x128xbf16>
    %181 = arith.extf %180 : vector<8x128xbf16> to vector<8x128xf32>
    %c2_80 = arith.constant 2 : index
    %c0_81 = arith.constant 0 : index
    %c0_82 = arith.constant 0 : index
    %182 = vector.load %arg3[%c2_80, %c0_81, %c0_82] : memref<8x8x128xbf16, #tpu.memory_space<vmem>>, vector<1x8x128xbf16>
    %183 = vector.shape_cast %182 : vector<1x8x128xbf16> to vector<8x128xbf16>
    %184 = arith.extf %183 : vector<8x128xbf16> to vector<8x128xf32>
    %185 = arith.mulf %181, %184 : vector<8x128xf32>
    %186 = vector.broadcast %141 : vector<8x1xf32> to vector<8x128xf32>
    %187 = arith.mulf %186, %185 : vector<8x128xf32>
    %188 = arith.addf %178, %187 : vector<8x128xf32>
    %c3_83 = arith.constant 3 : index
    %c0_84 = arith.constant 0 : index
    %c0_85 = arith.constant 0 : index
    %189 = vector.load %arg2[%c3_83, %c0_84, %c0_85] : memref<8x8x128xbf16, #tpu.memory_space<vmem>>, vector<1x8x128xbf16>
    %190 = vector.shape_cast %189 : vector<1x8x128xbf16> to vector<8x128xbf16>
    %191 = arith.extf %190 : vector<8x128xbf16> to vector<8x128xf32>
    %c3_86 = arith.constant 3 : index
    %c0_87 = arith.constant 0 : index
    %c0_88 = arith.constant 0 : index
    %192 = vector.load %arg3[%c3_86, %c0_87, %c0_88] : memref<8x8x128xbf16, #tpu.memory_space<vmem>>, vector<1x8x128xbf16>
    %193 = vector.shape_cast %192 : vector<1x8x128xbf16> to vector<8x128xbf16>
    %194 = arith.extf %193 : vector<8x128xbf16> to vector<8x128xf32>
    %195 = arith.mulf %191, %194 : vector<8x128xf32>
    %196 = vector.broadcast %143 : vector<8x1xf32> to vector<8x128xf32>
    %197 = arith.mulf %196, %195 : vector<8x128xf32>
    %198 = arith.addf %188, %197 : vector<8x128xf32>
    %c4_89 = arith.constant 4 : index
    %c0_90 = arith.constant 0 : index
    %c0_91 = arith.constant 0 : index
    %199 = vector.load %arg2[%c4_89, %c0_90, %c0_91] : memref<8x8x128xbf16, #tpu.memory_space<vmem>>, vector<1x8x128xbf16>
    %200 = vector.shape_cast %199 : vector<1x8x128xbf16> to vector<8x128xbf16>
    %201 = arith.extf %200 : vector<8x128xbf16> to vector<8x128xf32>
    %c4_92 = arith.constant 4 : index
    %c0_93 = arith.constant 0 : index
    %c0_94 = arith.constant 0 : index
    %202 = vector.load %arg3[%c4_92, %c0_93, %c0_94] : memref<8x8x128xbf16, #tpu.memory_space<vmem>>, vector<1x8x128xbf16>
    %203 = vector.shape_cast %202 : vector<1x8x128xbf16> to vector<8x128xbf16>
    %204 = arith.extf %203 : vector<8x128xbf16> to vector<8x128xf32>
    %205 = arith.mulf %201, %204 : vector<8x128xf32>
    %206 = vector.broadcast %145 : vector<8x1xf32> to vector<8x128xf32>
    %207 = arith.mulf %206, %205 : vector<8x128xf32>
    %208 = arith.addf %198, %207 : vector<8x128xf32>
    %c5_95 = arith.constant 5 : index
    %c0_96 = arith.constant 0 : index
    %c0_97 = arith.constant 0 : index
    %209 = vector.load %arg2[%c5_95, %c0_96, %c0_97] : memref<8x8x128xbf16, #tpu.memory_space<vmem>>, vector<1x8x128xbf16>
    %210 = vector.shape_cast %209 : vector<1x8x128xbf16> to vector<8x128xbf16>
    %211 = arith.extf %210 : vector<8x128xbf16> to vector<8x128xf32>
    %c5_98 = arith.constant 5 : index
    %c0_99 = arith.constant 0 : index
    %c0_100 = arith.constant 0 : index
    %212 = vector.load %arg3[%c5_98, %c0_99, %c0_100] : memref<8x8x128xbf16, #tpu.memory_space<vmem>>, vector<1x8x128xbf16>
    %213 = vector.shape_cast %212 : vector<1x8x128xbf16> to vector<8x128xbf16>
    %214 = arith.extf %213 : vector<8x128xbf16> to vector<8x128xf32>
    %215 = arith.mulf %211, %214 : vector<8x128xf32>
    %216 = vector.broadcast %147 : vector<8x1xf32> to vector<8x128xf32>
    %217 = arith.mulf %216, %215 : vector<8x128xf32>
    %218 = arith.addf %208, %217 : vector<8x128xf32>
    %c6_101 = arith.constant 6 : index
    %c0_102 = arith.constant 0 : index
    %c0_103 = arith.constant 0 : index
    %219 = vector.load %arg2[%c6_101, %c0_102, %c0_103] : memref<8x8x128xbf16, #tpu.memory_space<vmem>>, vector<1x8x128xbf16>
    %220 = vector.shape_cast %219 : vector<1x8x128xbf16> to vector<8x128xbf16>
    %221 = arith.extf %220 : vector<8x128xbf16> to vector<8x128xf32>
    %c6_104 = arith.constant 6 : index
    %c0_105 = arith.constant 0 : index
    %c0_106 = arith.constant 0 : index
    %222 = vector.load %arg3[%c6_104, %c0_105, %c0_106] : memref<8x8x128xbf16, #tpu.memory_space<vmem>>, vector<1x8x128xbf16>
    %223 = vector.shape_cast %222 : vector<1x8x128xbf16> to vector<8x128xbf16>
    %224 = arith.extf %223 : vector<8x128xbf16> to vector<8x128xf32>
    %225 = arith.mulf %221, %224 : vector<8x128xf32>
    %226 = vector.broadcast %149 : vector<8x1xf32> to vector<8x128xf32>
    %227 = arith.mulf %226, %225 : vector<8x128xf32>
    %228 = arith.addf %218, %227 : vector<8x128xf32>
    %c7_107 = arith.constant 7 : index
    %c0_108 = arith.constant 0 : index
    %c0_109 = arith.constant 0 : index
    %229 = vector.load %arg2[%c7_107, %c0_108, %c0_109] : memref<8x8x128xbf16, #tpu.memory_space<vmem>>, vector<1x8x128xbf16>
    %230 = vector.shape_cast %229 : vector<1x8x128xbf16> to vector<8x128xbf16>
    %231 = arith.extf %230 : vector<8x128xbf16> to vector<8x128xf32>
    %c7_110 = arith.constant 7 : index
    %c0_111 = arith.constant 0 : index
    %c0_112 = arith.constant 0 : index
    %232 = vector.load %arg3[%c7_110, %c0_111, %c0_112] : memref<8x8x128xbf16, #tpu.memory_space<vmem>>, vector<1x8x128xbf16>
    %233 = vector.shape_cast %232 : vector<1x8x128xbf16> to vector<8x128xbf16>
    %234 = arith.extf %233 : vector<8x128xbf16> to vector<8x128xf32>
    %235 = arith.mulf %231, %234 : vector<8x128xf32>
    %236 = vector.broadcast %151 : vector<8x1xf32> to vector<8x128xf32>
    %237 = arith.mulf %236, %235 : vector<8x128xf32>
    %238 = arith.addf %228, %237 : vector<8x128xf32>
    %239 = vector.broadcast %159 : vector<8x1xf32> to vector<8x128xf32>
    %240 = arith.mulf %238, %239 : vector<8x128xf32>
    %241 = arith.truncf %240 : vector<8x128xf32> to vector<8x128xbf16>
    %c0_113 = arith.constant 0 : index
    %c0_114 = arith.constant 0 : index
    %242 = vector.load %arg5[%c0_113, %c0_114] : memref<128x128xbf16, #tpu.memory_space<vmem>>, vector<128x128xbf16>
    %cst_115 = arith.constant dense<0.000000e+00> : vector<8x128xf32>
    %243 = tpu.matmul %241, %242, %cst_115 {dimension_numbers = #tpu.dot_dimension_numbers<[1], [0], [0], [1], [0, 0, 1, 1], [], []>} : vector<8x128xbf16>, vector<128x128xbf16>, vector<8x128xf32> -> vector<8x128xf32>
    %c0_116 = arith.constant 0 : index
    %c0_117 = arith.constant 0 : index
    %244 = vector.load %arg6[%c0_116, %c0_117] : memref<1x128xf32, #tpu.memory_space<vmem>>, vector<1x128xf32>
    %245 = vector.broadcast %244 : vector<1x128xf32> to vector<8x128xf32>
    %246 = arith.addf %243, %245 : vector<8x128xf32>
    %c0_118 = arith.constant 0 : index
    %c0_119 = arith.constant 0 : index
    %247 = vector.load %arg1[%c0_118, %c0_119] : memref<8x128xbf16, #tpu.memory_space<vmem>>, vector<8x128xbf16>
    %248 = arith.extf %247 : vector<8x128xbf16> to vector<8x128xf32>
    %249 = arith.addf %246, %248 : vector<8x128xf32>
    %c0_120 = arith.constant 0 : index
    %c0_121 = arith.constant 0 : index
    %250 = vector.load %arg7[%c0_120, %c0_121] : memref<8x128xf32, #tpu.memory_space<vmem>>, vector<8x128xf32>
    tpu.vector_store %arg7[%c0_120, %c0_121], %249 {strides = array<i32>} : memref<8x128xf32, #tpu.memory_space<vmem>>, vector<8x128xf32>,
    return
  }
  func.func @transform_0(%arg0: i32) -> (i32, i32) {
    %c0_i32 = arith.constant 0 : i32
    %c0_i32_0 = arith.constant 0 : i32
    return %arg0, %c0_i32 : i32, i32
  }
  func.func @transform_1(%arg0: i32) -> (i32, i32, i32) {
    %c0_i32 = arith.constant 0 : i32
    %c0_i32_0 = arith.constant 0 : i32
    %c0_i32_1 = arith.constant 0 : i32
    return %c0_i32, %arg0, %c0_i32_0 : i32, i32, i32
  }
  func.func @transform_2(%arg0: i32) -> (i32, i32, i32) {
    %c0_i32 = arith.constant 0 : i32
    %c0_i32_0 = arith.constant 0 : i32
    %c0_i32_1 = arith.constant 0 : i32
    return %c0_i32, %arg0, %c0_i32_0 : i32, i32, i32
  }
  func.func @transform_3(%arg0: i32) -> (i32, i32) {
    %c0_i32 = arith.constant 0 : i32
    %c0_i32_0 = arith.constant 0 : i32
    return %arg0, %c0_i32 : i32, i32
  }
  func.func @transform_4(%arg0: i32) -> (i32, i32) {
    %c0_i32 = arith.constant 0 : i32
    %c0_i32_0 = arith.constant 0 : i32
    %c0_i32_1 = arith.constant 0 : i32
    return %c0_i32, %c0_i32_0 : i32, i32
  }
  func.func @transform_5(%arg0: i32) -> (i32, i32) {
    %c0_i32 = arith.constant 0 : i32
    %c0_i32_0 = arith.constant 0 : i32
    %c0_i32_1 = arith.constant 0 : i32
    return %c0_i32, %c0_i32_0 : i32, i32
  }
  func.func @transform_6(%arg0: i32) -> (i32, i32) {
    %c0_i32 = arith.constant 0 : i32
    %c0_i32_0 = arith.constant 0 : i32
    return %arg0, %c0_i32 : i32, i32
  }
}

</mosaic_0001>

<llo_original>
// kernel: tpu_custom_call.1
$region0: #{tpu_custom_call.1}
  #allocation0 [shape = 'u32[]', space=smem, size = 0x4, offset = 0x4, fixed_abs, tag = 'smem constant byte address 0x4 - core index']
  #allocation1 [shape = 'u32[72,128]{1,0:T(1,128)}', space=vmem, size = 0x9000, scoped, tag = 'internal scratch']
  %s0 = inlined_call_operand.vmem [shape: bf16[16,128], index: 0, kind: input, shape index: {}]
  %s1 = inlined_call_operand.hbm [shape: bf16[8,16,128], index: 1, kind: input, shape index: {}]
  %s2 = inlined_call_operand.hbm [shape: bf16[8,16,128], index: 2, kind: input, shape index: {}]
  %s3 = inlined_call_operand.vmem [shape: f32[16,8], index: 3, kind: input, shape index: {}]
  %s4 = inlined_call_operand.hbm [shape: bf16[128,128], index: 4, kind: input, shape index: {}]
  %s5 = inlined_call_operand.vmem [shape: f32[1,128], index: 5, kind: input, shape index: {}]
  %s6 = inlined_call_operand.hbm [shape: f32[16,128], index: 6, kind: output, shape index: {}]
  %s7 = sld [smem:[#allocation0]]
  $region69: #{tpu_custom_call.1} parent=0
    _
  %s9 = ssub.s32 1, %s7
  %s10 = scalar_select 0, %s9, %s7
  $region1: #{tpu_custom_call.1} parent=0
    #allocation2 [shape = 'u8[32768]{0}', space=vmem, size = 0x8000, scoped, tag = 'input window, operand 1']
    #allocation3 [shape = 's32[2]{0}', space=sflag, size = 0x8, scoped, tag = 'scoped memory for tpu_custom_call.1']
    #allocation4 [shape = 's32[2]{0}', space=sflag, size = 0x8, scoped, tag = 'scoped memory for tpu_custom_call.1']
    #allocation5 [shape = 'u8[32768]{0}', space=vmem, size = 0x8000, scoped, tag = 'input window, operand 2']
    #allocation6 [shape = 's32[2]{0}', space=sflag, size = 0x8, scoped, tag = 'scoped memory for tpu_custom_call.1']
    #allocation7 [shape = 'u8[32768]{0}', space=vmem, size = 0x8000, scoped, tag = 'input window, operand 4, single buffered']
    #allocation8 [shape = 'u8[8192]{0}', space=vmem, size = 0x2000, scoped, tag = 'output window, operand 0']
    %11 = vsyncpa [#allocation3], 0
    %s12 = scalar_lea.sflag [#allocation3], 1
    %13 = vsyncpa %s12, 0
    %14 = vsyncpa [#allocation6], 0
    %s15 = scalar_lea.sflag [#allocation6], 1
    %16 = vsyncpa %s15, 0
    %17 = vsyncpa [#allocation4], 0
    %s18 = scalar_lea.sflag [#allocation4], 1
    %19 = vsyncpa %s18, 0
    loop: start=0, step=1, limit=4
    $region2: #{tpu_custom_call.1} parent=1 // loop_pre_header
      _
    $region3: #{tpu_custom_call.1} parent=1 // loop_header
      %s21 = sphi 0, %s25
      %p22 = scmp.ge.s32.totalorder %s21, 4
      %s31 = sphi 0, %s33
      %s34 = sphi 0, %s31
      %s35 = sphi 0, %s34
      %s51 = sphi 0, %s35
      %s57 = sphi 0, %s59
      %s60 = sphi 0, %s57
      %s61 = sphi 0, %s60
      %s77 = sphi 0, %s61
      %s83 = sphi 0, %s85
      %s86 = sphi 0, %s83
      %s87 = sphi 0, %s86
      %s103 = sphi 0, %s87
      %s109 = sphi 0, %s111
      %s112 = sphi 0, %s109
      %s113 = sphi 0, %s112
      %s129 = sphi 0, %s113
      %s133 = sphi 0, %s133
      %s135 = sphi 0, %s133
      %s136 = sphi 0, %s135
      %s150 = sphi 0, %s136
      %s154 = sphi 0, %s154
      %s156 = sphi 0, %s154
      %s157 = sphi 0, %s156
      %s171 = sphi 0, %s157
      %s177 = sphi 0, %s179
      %s180 = sphi 0, %s177
      %s181 = sphi 0, %s180
      %s197 = sphi 0, %s181
    $region4: #{tpu_custom_call.1} parent=1 // loop_header_branch
      %24 = sbr.rel (%p22) target = $region8
    $region5: #{tpu_custom_call.1} parent=1 // loop_body
      %s26 = ssub.s32 %s21, 1
      %s27 = ssub.s32 %s21, 2
      %s28 = sadd.s32 %s21, 1
      %s29 = ssub.s32 %s21, %s28
      %p30 = scmp.eq.s32.totalorder %s29, 0
      %s32 = sadd.s32 %s31, 1
      %s33 = scalar_select %p30, %s31, %s32
      %p36 = pneg %p30
      %p37 = scmp.eq.s32.totalorder %s21, 1
      %p38 = por %p36, %p37
      %p39 = scmp.ne.s32.totalorder %s31, %s34
      %p40 = scmp.eq.s32.totalorder %s21, 0
      %p41 = por %p39, %p40
      %p42 = scmp.ne.s32.totalorder %s31, %s34
      %p43 = scmp.eq.s32.totalorder %s26, 1
      %p44 = por %p42, %p43
      %p45 = scmp.ne.s32.totalorder %s34, %s35
      %p46 = scmp.eq.s32.totalorder %s26, 0
      %p47 = por %p45, %p46
      %p48 = scmp.ne.s32.totalorder %s34, %s35
      %p49 = scmp.eq.s32.totalorder %s27, 1
      %p50 = por %p48, %p49
      %p52 = scmp.ne.s32.totalorder %s35, %s51
      %p53 = scmp.eq.s32.totalorder %s27, 0
      %p54 = por %p52, %p53
      %s55 = ssub.s32 %s21, %s28
      %p56 = scmp.eq.s32.totalorder %s55, 0
      %s58 = sadd.s32 %s57, 1
      %s59 = scalar_select %p56, %s57, %s58
      %p62 = pneg %p56
      %p63 = scmp.eq.s32.totalorder %s21, 1
      %p64 = por %p62, %p63
      %p65 = scmp.ne.s32.totalorder %s57, %s60
      %p66 = scmp.eq.s32.totalorder %s21, 0
      %p67 = por %p65, %p66
      %p68 = scmp.ne.s32.totalorder %s57, %s60
      %p69 = scmp.eq.s32.totalorder %s26, 1
      %p70 = por %p68, %p69
      %p71 = scmp.ne.s32.totalorder %s60, %s61
      %p72 = scmp.eq.s32.totalorder %s26, 0
      %p73 = por %p71, %p72
      %p74 = scmp.ne.s32.totalorder %s60, %s61
      %p75 = scmp.eq.s32.totalorder %s27, 1
      %p76 = por %p74, %p75
      %p78 = scmp.ne.s32.totalorder %s61, %s77
      %p79 = scmp.eq.s32.totalorder %s27, 0
      %p80 = por %p78, %p79
      %s81 = ssub.s32 %s21, %s28
      %p82 = scmp.eq.s32.totalorder %s81, 0
      %s84 = sadd.s32 %s83, 1
      %s85 = scalar_select %p82, %s83, %s84
      %p88 = pneg %p82
      %p89 = scmp.eq.s32.totalorder %s21, 1
      %p90 = por %p88, %p89
      %p91 = scmp.ne.s32.totalorder %s83, %s86
      %p92 = scmp.eq.s32.totalorder %s21, 0
      %p93 = por %p91, %p92
      %p94 = scmp.ne.s32.totalorder %s83, %s86
      %p95 = scmp.eq.s32.totalorder %s26, 1
      %p96 = por %p94, %p95
      %p97 = scmp.ne.s32.totalorder %s86, %s87
      %p98 = scmp.eq.s32.totalorder %s26, 0
      %p99 = por %p97, %p98
      %p100 = scmp.ne.s32.totalorder %s86, %s87
      %p101 = scmp.eq.s32.totalorder %s27, 1
      %p102 = por %p100, %p101
      %p104 = scmp.ne.s32.totalorder %s87, %s103
      %p105 = scmp.eq.s32.totalorder %s27, 0
      %p106 = por %p104, %p105
      %s107 = ssub.s32 %s21, %s28
      %p108 = scmp.eq.s32.totalorder %s107, 0
      %s110 = sadd.s32 %s109, 1
      %s111 = scalar_select %p108, %s109, %s110
      %p114 = pneg %p108
      %p115 = scmp.eq.s32.totalorder %s21, 1
      %p116 = por %p114, %p115
      %p117 = scmp.ne.s32.totalorder %s109, %s112
      %p118 = scmp.eq.s32.totalorder %s21, 0
      %p119 = por %p117, %p118
      %p120 = scmp.ne.s32.totalorder %s109, %s112
      %p121 = scmp.eq.s32.totalorder %s26, 1
      %p122 = por %p120, %p121
      %p123 = scmp.ne.s32.totalorder %s112, %s113
      %p124 = scmp.eq.s32.totalorder %s26, 0
      %p125 = por %p123, %p124
      %p126 = scmp.ne.s32.totalorder %s112, %s113
      %p127 = scmp.eq.s32.totalorder %s27, 1
      %p128 = por %p126, %p127
      %p130 = scmp.ne.s32.totalorder %s113, %s129
      %p131 = scmp.eq.s32.totalorder %s27, 0
      %p132 = por %p130, %p131
      %s134 = sadd.s32 %s133, 1
      %p137 = scmp.eq.s32.totalorder %s21, 1
      %p138 = scmp.ne.s32.totalorder %s133, %s135
      %p139 = scmp.eq.s32.totalorder %s21, 0
      %p140 = por %p138, %p139
      %p141 = scmp.ne.s32.totalorder %s133, %s135
      %p142 = scmp.eq.s32.totalorder %s26, 1
      %p143 = por %p141, %p142
      %p144 = scmp.ne.s32.totalorder %s135, %s136
      %p145 = scmp.eq.s32.totalorder %s26, 0
      %p146 = por %p144, %p145
      %p147 = scmp.ne.s32.totalorder %s135, %s136
      %p148 = scmp.eq.s32.totalorder %s27, 1
      %p149 = por %p147, %p148
      %p151 = scmp.ne.s32.totalorder %s136, %s150
      %p152 = scmp.eq.s32.totalorder %s27, 0
      %p153 = por %p151, %p152
      %s155 = sadd.s32 %s154, 1
      %p158 = scmp.eq.s32.totalorder %s21, 1
      %p159 = scmp.ne.s32.totalorder %s154, %s156
      %p160 = scmp.eq.s32.totalorder %s21, 0
      %p161 = por %p159, %p160
      %p162 = scmp.ne.s32.totalorder %s154, %s156
      %p163 = scmp.eq.s32.totalorder %s26, 1
      %p164 = por %p162, %p163
      %p165 = scmp.ne.s32.totalorder %s156, %s157
      %p166 = scmp.eq.s32.totalorder %s26, 0
      %p167 = por %p165, %p166
      %p168 = scmp.ne.s32.totalorder %s156, %s157
      %p169 = scmp.eq.s32.totalorder %s27, 1
      %p170 = por %p168, %p169
      %p172 = scmp.ne.s32.totalorder %s157, %s171
      %p173 = scmp.eq.s32.totalorder %s27, 0
      %p174 = por %p172, %p173
      %s175 = ssub.s32 %s21, %s28
      %p176 = scmp.eq.s32.totalorder %s175, 0
      %s178 = sadd.s32 %s177, 1
      %s179 = scalar_select %p176, %s177, %s178
      %p182 = pneg %p176
      %p183 = scmp.eq.s32.totalorder %s21, 1
      %p184 = por %p182, %p183
      %p185 = scmp.ne.s32.totalorder %s177, %s180
      %p186 = scmp.eq.s32.totalorder %s21, 0
      %p187 = por %p185, %p186
      %p188 = scmp.ne.s32.totalorder %s177, %s180
      %p189 = scmp.eq.s32.totalorder %s26, 1
      %p190 = por %p188, %p189
      %p191 = scmp.ne.s32.totalorder %s180, %s181
      %p192 = scmp.eq.s32.totalorder %s26, 0
      %p193 = por %p191, %p192
      %p194 = scmp.ne.s32.totalorder %s180, %s181
      %p195 = scmp.eq.s32.totalorder %s27, 1
      %p196 = por %p194, %p195
      %p198 = scmp.ne.s32.totalorder %s181, %s197
      %p199 = scmp.eq.s32.totalorder %s27, 0
      %p200 = por %p198, %p199
      %p201 = scmp.le.s32.totalorder 1, %s21
      %p202 = scmp.lt.s32.totalorder %s21, 3
      %p203 = pnand %p201, %p202
      %p204 = pneg %p203
      // Predicated region
      $region9: #{tpu_custom_call.1} parent=5 // pred_check
        _
      $region10: #{tpu_custom_call.1} parent=5 // pred_check_branch
        %206 = sbr.rel (%p203) target = $region12
      $region11: #{tpu_custom_call.1} parent=5 // pred_region
        %s207 = ssub.s32 %s21, 1
        // Predicated region
        $region13: #{tpu_custom_call.1} parent=11 // pred_check
          %p208 = pneg %p146
        $region14: #{tpu_custom_call.1} parent=11 // pred_check_branch
          %210 = sbr.rel (%p208) target = $region16
        $region15: #{tpu_custom_call.1} parent=11 // pred_region
          %212 = vsyncadd [#allocation6], 0
          %s213 = sshll.u32 %s4, 4
          %s214 = int_to_ptr.hbm [resolvable:$true] %s213
          %s215 = sshll.u32 [#allocation7], 4
          %s216 = int_to_ptr.vmem [resolvable:$true] %s215
          %221 = dma.hbm_to_vmem [thread:$0]  %s214, 1024, %s216, [#allocation6], 64, 64, 4
        $region16: #{tpu_custom_call.1} parent=11 // pred_fallthru
          _
        // Predicated region
        $region17: #{tpu_custom_call.1} parent=11 // pred_check
          %p222 = pneg %p167
        $region18: #{tpu_custom_call.1} parent=11 // pred_check_branch
          %224 = sbr.rel (%p222) target = $region20
        $region19: #{tpu_custom_call.1} parent=11 // pred_region
          _
        $region20: #{tpu_custom_call.1} parent=11 // pred_fallthru
          _
      $region12: #{tpu_custom_call.1} parent=5 // pred_fallthru
        _
      %p225 = scmp.lt.s32.totalorder %s21, 2
      // Predicated region
      $region21: #{tpu_custom_call.1} parent=5 // pred_check
        %p226 = pneg %p225
      $region22: #{tpu_custom_call.1} parent=5 // pred_check_branch
        %228 = sbr.rel (%p226) target = $region24
      $region23: #{tpu_custom_call.1} parent=5 // pred_region
        // Predicated region
        $region25: #{tpu_custom_call.1} parent=23 // pred_check
          %p229 = pneg %p41
        $region26: #{tpu_custom_call.1} parent=23 // pred_check_branch
          %231 = sbr.rel (%p229) target = $region28
        $region27: #{tpu_custom_call.1} parent=23 // pred_region
          %p232 = scmp.lt.s32.totalorder %s21, 1
          %s233 = scalar_select %p232, %s21, 1
          %s234 = smul.addr %s233, 4
          %s235 = scalar_lea.vmem %s0, %s234
        $region28: #{tpu_custom_call.1} parent=23 // pred_fallthru
          _
        // Predicated region
        $region29: #{tpu_custom_call.1} parent=23 // pred_check
          %p236 = pneg %p67
        $region30: #{tpu_custom_call.1} parent=23 // pred_check_branch
          %238 = sbr.rel (%p236) target = $region32
        $region31: #{tpu_custom_call.1} parent=23 // pred_region
          %s239 = sand.u32 %s57, 1
          %s240 = scalar_lea.sflag [#allocation3], %s239
          %s241 = sand.u32 %s57, 1
          %s242 = smul.addr %s241, 32
          %s243 = scalar_lea.vmem [#allocation2], %s242
          %245 = vsyncadd %s240, 0
          %s246 = smul.addr %s21, 4
          %s247 = scalar_lea.hbm %s1, %s246
          %s248 = sshll.u32 %s247, 4
          %s249 = int_to_ptr.hbm [resolvable:$true] %s248
          %s250 = sshll.u32 %s243, 4
          %s251 = int_to_ptr.vmem [resolvable:$true] %s250
          %256 = dma.hbm_to_vmem [thread:$0]  %s249, 512, %s251, %s240, 128, 64, 4
        $region32: #{tpu_custom_call.1} parent=23 // pred_fallthru
          _
        // Predicated region
        $region33: #{tpu_custom_call.1} parent=23 // pred_check
          %p257 = pneg %p93
        $region34: #{tpu_custom_call.1} parent=23 // pred_check_branch
          %259 = sbr.rel (%p257) target = $region36
        $region35: #{tpu_custom_call.1} parent=23 // pred_region
          %s260 = sand.u32 %s21, 1
          %s261 = scalar_lea.sflag [#allocation6], %s260
          %s262 = sand.u32 %s83, 1
          %s263 = smul.addr %s262, 32
          %s264 = scalar_lea.vmem [#allocation5], %s263
          %266 = vsyncadd %s261, 0
          %s267 = smul.addr %s21, 4
          %s268 = scalar_lea.hbm %s2, %s267
          %s269 = sshll.u32 %s268, 4
          %s270 = int_to_ptr.hbm [resolvable:$true] %s269
          %s271 = sshll.u32 %s264, 4
          %s272 = int_to_ptr.vmem [resolvable:$true] %s271
          %277 = dma.hbm_to_vmem [thread:$0]  %s270, 512, %s272, %s261, 128, 64, 4
        $region36: #{tpu_custom_call.1} parent=23 // pred_fallthru
          _
        // Predicated region
        $region37: #{tpu_custom_call.1} parent=23 // pred_check
          %p278 = pneg %p119
        $region38: #{tpu_custom_call.1} parent=23 // pred_check_branch
          %280 = sbr.rel (%p278) target = $region40
        $region39: #{tpu_custom_call.1} parent=23 // pred_region
          %p281 = scmp.lt.s32.totalorder %s21, 1
          %s282 = scalar_select %p281, %s21, 1
          %s283 = smul.addr %s282, 8
          %s284 = scalar_lea.vmem %s3, %s283
        $region40: #{tpu_custom_call.1} parent=23 // pred_fallthru
          _
      $region24: #{tpu_custom_call.1} parent=5 // pred_fallthru
        _
      %p285 = scmp.le.s32.totalorder 1, %s21
      %p286 = scmp.lt.s32.totalorder %s21, 3
      %p287 = pnand %p285, %p286
      %p288 = pneg %p287
      // Predicated region
      $region41: #{tpu_custom_call.1} parent=5 // pred_check
        _
      $region42: #{tpu_custom_call.1} parent=5 // pred_check_branch
        %290 = sbr.rel (%p287) target = $region44
      $region43: #{tpu_custom_call.1} parent=5 // pred_region
        %s291 = ssub.s32 %s21, 1
        %s292 = sand.u32 %s60, 1
        %s293 = scalar_lea.sflag [#allocation3], %s292
        %s294 = sand.u32 %s60, 1
        %s295 = smul.addr %s294, 32
        %s296 = scalar_lea.vmem [#allocation2], %s295
        // Predicated region
        $region45: #{tpu_custom_call.1} parent=43 // pred_check
          %p297 = pneg %p73
        $region46: #{tpu_custom_call.1} parent=43 // pred_check_branch
          %299 = sbr.rel (%p297) target = $region48
        $region47: #{tpu_custom_call.1} parent=43 // pred_region
          %301 = dma.done %s293, 512
        $region48: #{tpu_custom_call.1} parent=43 // pred_fallthru
          _
        %s302 = sand.u32 %s26, 1
        %s303 = scalar_lea.sflag [#allocation6], %s302
        %s304 = sand.u32 %s86, 1
        %s305 = smul.addr %s304, 32
        %s306 = scalar_lea.vmem [#allocation5], %s305
        // Predicated region
        $region49: #{tpu_custom_call.1} parent=43 // pred_check
          %p307 = pneg %p99
        $region50: #{tpu_custom_call.1} parent=43 // pred_check_branch
          %309 = sbr.rel (%p307) target = $region52
        $region51: #{tpu_custom_call.1} parent=43 // pred_region
          %311 = dma.done %s303, 512
        $region52: #{tpu_custom_call.1} parent=43 // pred_fallthru
          _
        // Predicated region
        $region53: #{tpu_custom_call.1} parent=43 // pred_check
          %p312 = pneg %p146
        $region54: #{tpu_custom_call.1} parent=43 // pred_check_branch
          %314 = sbr.rel (%p312) target = $region56
        $region55: #{tpu_custom_call.1} parent=43 // pred_region
          %316 = dma.done [#allocation6], 1024
        $region56: #{tpu_custom_call.1} parent=43 // pred_fallthru
          _
        %p317 = scmp.lt.s32.totalorder %s26, 1
        %s318 = scalar_select %p317, %s26, 1
        %s319 = smul.addr %s318, 4
        %s320 = scalar_lea.vmem %s0, %s319
        %p321 = pneg %p47
        %p322 = pneg %p44
        %s323 = sand.u32 %s60, 1
        %s324 = scalar_lea.sflag [#allocation3], %s323
        %s325 = sand.u32 %s60, 1
        %s326 = smul.addr %s325, 32
        %s327 = scalar_lea.vmem [#allocation2], %s326
        %p328 = pneg %p73
        %p329 = pneg %p70
        %s330 = sand.u32 %s26, 1
        %s331 = scalar_lea.sflag [#allocation6], %s330
        %s332 = sand.u32 %s86, 1
        %s333 = smul.addr %s332, 32
        %s334 = scalar_lea.vmem [#allocation5], %s333
        %p335 = pneg %p99
        %p336 = pneg %p96
        %p337 = scmp.lt.s32.totalorder %s26, 1
        %s338 = scalar_select %p337, %s26, 1
        %s339 = smul.addr %s338, 8
        %s340 = scalar_lea.vmem %s3, %s339
        %p341 = pneg %p125
        %p342 = pneg %p122
        %p343 = pneg %p146
        %p344 = pneg %p143
        %p345 = pneg %p167
        %p346 = pneg %p164
        %p347 = pneg %p193
        %p348 = pneg %p190
        %s349 = sand.u32 %s180, 1
        %s350 = scalar_lea.sflag [#allocation4], %s349
        %s351 = sand.u32 %s180, 1
        %s352 = smul.addr %s351, 8
        %s353 = scalar_lea.vmem [#allocation8], %s352
        %p354 = scmp.lt.s32.totalorder %s26, 1
        %s355 = scalar_select %p354, %s26, 1
        %s356 = smul.addr %s355, 4
        %s357 = scalar_lea.vmem %s0, %s356
        %p358 = scmp.lt.s32.totalorder %s26, 1
        %s359 = scalar_select %p358, %s26, 1
        %s360 = smul.addr %s359, 8
        %s361 = scalar_lea.vmem %s3, %s360
        %v362 = vld [vmem:[%s361] sm:$0xff]
        %v363 = vld [vmem:[%s296] sm:$0xf]
        %v364 = vunpack.c.l.bf16 %v363
        %v365 = vld [vmem:[%s306] sm:$0xf]
        %v366 = vunpack.c.l.bf16 %v365
        %v367 = vmul.f32 %v364, %v366
        %368 = vadd.xlane.f32.xlu0 %v367
        %v369 = vpop.xlane.xlu0 %368
        %vm370 = vcmp.gt.f32.partialorder %v369, 0.0
        %v371 = vmul.f32 %v369, 0.2
        %v372 = vsel %vm370, %v369, %v371
        %v373 = vadd.f32 %v372, %v362
        %s374 = scalar_lea.vmem %s296, 4 [#allocation2]
        %v375 = vld [vmem:[%s374] sm:$0xf]
        %v376 = vunpack.c.l.bf16 %v375
        %s377 = scalar_lea.vmem %s306, 4 [#allocation5]
        %v378 = vld [vmem:[%s377] sm:$0xf]
        %v379 = vunpack.c.l.bf16 %v378
        %v380 = vmul.f32 %v376, %v379
        %381 = vadd.xlane.f32.xlu0 %v380
        %v382 = vpop.xlane.xlu0 %381
        %vm383 = vcmp.gt.f32.partialorder %v382, 0.0
        %v384 = vmul.f32 %v382, 0.2
        %v385 = vsel %vm383, %v382, %v384
        %v386 = vadd.f32 %v385, %v362
        %s387 = scalar_lea.vmem %s296, 8 [#allocation2]
        %v388 = vld [vmem:[%s387] sm:$0xf]
        %v389 = vunpack.c.l.bf16 %v388
        %s390 = scalar_lea.vmem %s306, 8 [#allocation5]
        %v391 = vld [vmem:[%s390] sm:$0xf]
        %v392 = vunpack.c.l.bf16 %v391
        %v393 = vmul.f32 %v389, %v392
        %394 = vadd.xlane.f32.xlu0 %v393
        %v395 = vpop.xlane.xlu0 %394
        %vm396 = vcmp.gt.f32.partialorder %v395, 0.0
        %v397 = vmul.f32 %v395, 0.2
        %v398 = vsel %vm396, %v395, %v397
        %v399 = vadd.f32 %v398, %v362
        %s400 = scalar_lea.vmem %s296, 12 [#allocation2]
        %v401 = vld [vmem:[%s400] sm:$0xf]
        %v402 = vunpack.c.l.bf16 %v401
        %s403 = scalar_lea.vmem %s306, 12 [#allocation5]
        %v404 = vld [vmem:[%s403] sm:$0xf]
        %v405 = vunpack.c.l.bf16 %v404
        %v406 = vmul.f32 %v402, %v405
        %407 = vadd.xlane.f32.xlu0 %v406
        %v408 = vpop.xlane.xlu0 %407
        %vm409 = vcmp.gt.f32.partialorder %v408, 0.0
        %v410 = vmul.f32 %v408, 0.2
        %v411 = vsel %vm409, %v408, %v410
        %v412 = vadd.f32 %v411, %v362
        %s413 = scalar_lea.vmem %s296, 16 [#allocation2]
        %v414 = vld [vmem:[%s413] sm:$0xf]
        %v415 = vunpack.c.l.bf16 %v414
        %s416 = scalar_lea.vmem %s306, 16 [#allocation5]
        %v417 = vld [vmem:[%s416] sm:$0xf]
        %v418 = vunpack.c.l.bf16 %v417
        %v419 = vmul.f32 %v415, %v418
        %420 = vadd.xlane.f32.xlu0 %v419
        %v421 = vpop.xlane.xlu0 %420
        %vm422 = vcmp.gt.f32.partialorder %v421, 0.0
        %v423 = vmul.f32 %v421, 0.2
        %v424 = vsel %vm422, %v421, %v423
        %v425 = vadd.f32 %v424, %v362
        %s426 = scalar_lea.vmem %s296, 20 [#allocation2]
        %v427 = vld [vmem:[%s426] sm:$0xf]
        %v428 = vunpack.c.l.bf16 %v427
        %s429 = scalar_lea.vmem %s306, 20 [#allocation5]
        %v430 = vld [vmem:[%s429] sm:$0xf]
        %v431 = vunpack.c.l.bf16 %v430
        %v432 = vmul.f32 %v428, %v431
        %433 = vadd.xlane.f32.xlu0 %v432
        %v434 = vpop.xlane.xlu0 %433
        %vm435 = vcmp.gt.f32.partialorder %v434, 0.0
        %v436 = vmul.f32 %v434, 0.2
        %v437 = vsel %vm435, %v434, %v436
        %v438 = vadd.f32 %v437, %v362
        %s439 = scalar_lea.vmem %s296, 24 [#allocation2]
        %v440 = vld [vmem:[%s439] sm:$0xf]
        %v441 = vunpack.c.l.bf16 %v440
        %s442 = scalar_lea.vmem %s306, 24 [#allocation5]
        %v443 = vld [vmem:[%s442] sm:$0xf]
        %v444 = vunpack.c.l.bf16 %v443
        %v445 = vmul.f32 %v441, %v444
        %446 = vadd.xlane.f32.xlu0 %v445
        %v447 = vpop.xlane.xlu0 %446
        %vm448 = vcmp.gt.f32.partialorder %v447, 0.0
        %v449 = vmul.f32 %v447, 0.2
        %v450 = vsel %vm448, %v447, %v449
        %v451 = vadd.f32 %v450, %v362
        %s452 = scalar_lea.vmem %s296, 28 [#allocation2]
        %v453 = vld [vmem:[%s452] sm:$0xf]
        %v454 = vunpack.c.l.bf16 %v453
        %s455 = scalar_lea.vmem %s306, 28 [#allocation5]
        %v456 = vld [vmem:[%s455] sm:$0xf]
        %v457 = vunpack.c.l.bf16 %v456
        %v458 = vmul.f32 %v454, %v457
        %459 = vadd.xlane.f32.xlu0 %v458
        %v460 = vpop.xlane.xlu0 %459
        %vm461 = vcmp.gt.f32.partialorder %v460, 0.0
        %v462 = vmul.f32 %v460, 0.2
        %v463 = vsel %vm461, %v460, %v462
        %v464 = vadd.f32 %v463, %v362
        %466 = vrot.lane.b32.xlu0 %v386, 127
        %v467 = vpop.permute.xlu0 %466
        %v469 = vmax.f32 %v373, %v467
        %471 = vrot.lane.b32.xlu0 %v399, 126
        %v472 = vpop.permute.xlu0 %471
        %v474 = vmax.f32 %v469, %v472
        %476 = vrot.lane.b32.xlu0 %v412, 125
        %v477 = vpop.permute.xlu0 %476
        %v479 = vmax.f32 %v474, %v477
        %481 = vrot.lane.b32.xlu0 %v425, 124
        %v482 = vpop.permute.xlu0 %481
        %v484 = vmax.f32 %v479, %v482
        %486 = vrot.lane.b32.xlu0 %v438, 123
        %v487 = vpop.permute.xlu0 %486
        %v489 = vmax.f32 %v484, %v487
        %491 = vrot.lane.b32.xlu0 %v451, 122
        %v492 = vpop.permute.xlu0 %491
        %v494 = vmax.f32 %v489, %v492
        %496 = vrot.lane.b32.xlu0 %v464, 121
        %v497 = vpop.permute.xlu0 %496
        %v499 = vmax.f32 %v494, %v497
        %v500 = vsub.f32 %v373, %v499
        %v501 = vmul.f32 %v500, 1.442695
        %v502 = vpow.pop %v501
        %504 = vrot.lane.b32.xlu0 %v499, 1
        %v505 = vpop.permute.xlu0 %504
        %v507 = vsub.f32 %v386, %v505
        %v508 = vmul.f32 %v507, 1.442695
        %v509 = vpow.pop %v508
        %510 = vrot.lane.b32.xlu0 %v499, 2
        %v511 = vpop.permute.xlu0 %510
        %v513 = vsub.f32 %v399, %v511
        %v514 = vmul.f32 %v513, 1.442695
        %v515 = vpow.pop %v514
        %516 = vrot.lane.b32.xlu0 %v499, 3
        %v517 = vpop.permute.xlu0 %516
        %v519 = vsub.f32 %v412, %v517
        %v520 = vmul.f32 %v519, 1.442695
        %v521 = vpow.pop %v520
        %522 = vrot.lane.b32.xlu0 %v499, 4
        %v523 = vpop.permute.xlu0 %522
        %v525 = vsub.f32 %v425, %v523
        %v526 = vmul.f32 %v525, 1.442695
        %v527 = vpow.pop %v526
        %528 = vrot.lane.b32.xlu0 %v499, 5
        %v529 = vpop.permute.xlu0 %528
        %v531 = vsub.f32 %v438, %v529
        %v532 = vmul.f32 %v531, 1.442695
        %v533 = vpow.pop %v532
        %534 = vrot.lane.b32.xlu0 %v499, 6
        %v535 = vpop.permute.xlu0 %534
        %v537 = vsub.f32 %v451, %v535
        %v538 = vmul.f32 %v537, 1.442695
        %v539 = vpow.pop %v538
        %540 = vrot.lane.b32.xlu0 %v499, 7
        %v541 = vpop.permute.xlu0 %540
        %v543 = vsub.f32 %v464, %v541
        %v544 = vmul.f32 %v543, 1.442695
        %v545 = vpow.pop %v544
        %547 = vrot.lane.b32.xlu0 %v509, 127
        %v548 = vpop.permute.xlu0 %547
        %v550 = vadd.f32 %v502, %v548
        %552 = vrot.lane.b32.xlu0 %v515, 126
        %v553 = vpop.permute.xlu0 %552
        %v555 = vadd.f32 %v550, %v553
        %557 = vrot.lane.b32.xlu0 %v521, 125
        %v558 = vpop.permute.xlu0 %557
        %v560 = vadd.f32 %v555, %v558
        %562 = vrot.lane.b32.xlu0 %v527, 124
        %v563 = vpop.permute.xlu0 %562
        %v565 = vadd.f32 %v560, %v563
        %567 = vrot.lane.b32.xlu0 %v533, 123
        %v568 = vpop.permute.xlu0 %567
        %v570 = vadd.f32 %v565, %v568
        %572 = vrot.lane.b32.xlu0 %v539, 122
        %v573 = vpop.permute.xlu0 %572
        %v575 = vadd.f32 %v570, %v573
        %577 = vrot.lane.b32.xlu0 %v545, 121
        %v578 = vpop.permute.xlu0 %577
        %v580 = vadd.f32 %v575, %v578
        %v581 = vrcp.pop %v580
        %583 = vset.pattern.permute.xlu0 0
        %584 = vperm.xlu0 %583, %v502
        %v585 = vpop.permute.xlu0 %584
        %v587 = vmul.f32 %v585, %v367
        %588 = vset.pattern.permute.xlu0 1
        %589 = vperm.xlu0 %588, %v509
        %v590 = vpop.permute.xlu0 %589
        %v592 = vmul.f32 %v590, %v380
        %v593 = vadd.f32 %v587, %v592
        %594 = vset.pattern.permute.xlu0 2
        %595 = vperm.xlu0 %594, %v515
        %v596 = vpop.permute.xlu0 %595
        %v598 = vmul.f32 %v596, %v393
        %v599 = vadd.f32 %v593, %v598
        %600 = vset.pattern.permute.xlu0 3
        %601 = vperm.xlu0 %600, %v521
        %v602 = vpop.permute.xlu0 %601
        %v604 = vmul.f32 %v602, %v406
        %v605 = vadd.f32 %v599, %v604
        %606 = vset.pattern.permute.xlu0 4
        %607 = vperm.xlu0 %606, %v527
        %v608 = vpop.permute.xlu0 %607
        %v610 = vmul.f32 %v608, %v419
        %v611 = vadd.f32 %v605, %v610
        %612 = vset.pattern.permute.xlu0 5
        %613 = vperm.xlu0 %612, %v533
        %v614 = vpop.permute.xlu0 %613
        %v616 = vmul.f32 %v614, %v432
        %v617 = vadd.f32 %v611, %v616
        %618 = vset.pattern.permute.xlu0 6
        %619 = vperm.xlu0 %618, %v539
        %v620 = vpop.permute.xlu0 %619
        %v622 = vmul.f32 %v620, %v445
        %v623 = vadd.f32 %v617, %v622
        %624 = vset.pattern.permute.xlu0 7
        %625 = vperm.xlu0 %624, %v545
        %v626 = vpop.permute.xlu0 %625
        %v628 = vmul.f32 %v626, %v458
        %v629 = vadd.f32 %v623, %v628
        %631 = vset.pattern.permute.xlu0 0
        %632 = vperm.xlu0 %631, %v581
        %v633 = vpop.permute.xlu0 %632
        %v635 = vmul.f32 %v629, %v633
        %v636 = vpack.c.bf16 %v635, %v635
        %v637 = vld [vmem:[#allocation7] sm:$0xf]
        %v638 = vld [vmem:[#allocation7 + $0x4] sm:$0xf]
        %v639 = vld [vmem:[#allocation7 + $0x8] sm:$0xf]
        %v640 = vld [vmem:[#allocation7 + $0xc] sm:$0xf]
        %v641 = vld [vmem:[#allocation7 + $0x10] sm:$0xf]
        %v642 = vld [vmem:[#allocation7 + $0x14] sm:$0xf]
        %v643 = vld [vmem:[#allocation7 + $0x18] sm:$0xf]
        %v644 = vld [vmem:[#allocation7 + $0x1c] sm:$0xf]
        %v645 = vld [vmem:[#allocation7 + $0x20] sm:$0xf]
        %v646 = vld [vmem:[#allocation7 + $0x24] sm:$0xf]
        %v647 = vld [vmem:[#allocation7 + $0x28] sm:$0xf]
        %v648 = vld [vmem:[#allocation7 + $0x2c] sm:$0xf]
        %v649 = vld [vmem:[#allocation7 + $0x30] sm:$0xf]
        %v650 = vld [vmem:[#allocation7 + $0x34] sm:$0xf]
        %v651 = vld [vmem:[#allocation7 + $0x38] sm:$0xf]
        %v652 = vld [vmem:[#allocation7 + $0x3c] sm:$0xf]
        %v653 = vld [vmem:[%s5] sm:$0x1]
        %v655 = vperm.slane %v653, 0
        %v673 = vunpack.c.l.b16 %v637
        %v674 = vunpack.c.l.b16 %v638
        %v675 = vunpack.c.l.b16 %v639
        %v676 = vunpack.c.l.b16 %v640
        %v677 = vunpack.c.l.b16 %v641
        %v678 = vunpack.c.l.b16 %v642
        %v679 = vunpack.c.l.b16 %v643
        %v680 = vunpack.c.l.b16 %v644
        %v681 = vunpack.c.l.b16 %v645
        %v682 = vunpack.c.l.b16 %v646
        %v683 = vunpack.c.l.b16 %v647
        %v684 = vunpack.c.l.b16 %v648
        %v685 = vunpack.c.l.b16 %v649
        %v686 = vunpack.c.l.b16 %v650
        %v687 = vunpack.c.l.b16 %v651
        %v688 = vunpack.c.l.b16 %v652
        %v689 = vpack.c.b16 %v674, %v673
        %v690 = vpack.c.b16 %v676, %v675
        %v691 = vpack.c.b16 %v678, %v677
        %v692 = vpack.c.b16 %v680, %v679
        %v693 = vpack.c.b16 %v682, %v681
        %v694 = vpack.c.b16 %v684, %v683
        %v695 = vpack.c.b16 %v686, %v685
        %v696 = vpack.c.b16 %v688, %v687
        %705 = vmatpush.bf16.msra.mxu0 %v696
        %706 = vmatpush.bf16.msra.mxu0 %v695
        %707 = vmatpush.bf16.msra.mxu0 %v694
        %708 = vmatpush.bf16.msra.mxu0 %v693
        %709 = vmatpush.bf16.msra.mxu0 %v692
        %710 = vmatpush.bf16.msra.mxu0 %v691
        %711 = vmatpush.bf16.msra.mxu0 %v690
        %712 = vmatpush.bf16.msra.mxu0 %v689
        %713 = vmatmul.bf16.gmra.mxu0 %v636
        %v714 = vpop.f32.mrf.mxu0
        %v715 = vadd.f32 %v655, %v714
        %v716 = vpop.f32.mrf.mxu0
        %717 = vdwg.mxu0
        %v718 = vld [vmem:[%s357] sm:$0xf]
        %v719 = vunpack.c.l.bf16 %v718
        %v720 = vadd.f32 %v715, %v719
        %721 = vst [vmem:[%s353] sm:$0xff] %v720
        %s722 = sand.u32 %s180, 1
        %s723 = scalar_lea.sflag [#allocation4], %s722
        %s724 = sand.u32 %s180, 1
        %s725 = smul.addr %s724, 8
        %s726 = scalar_lea.vmem [#allocation8], %s725
        // Predicated region
        $region57: #{tpu_custom_call.1} parent=43 // pred_check
          %p727 = pneg %p190
        $region58: #{tpu_custom_call.1} parent=43 // pred_check_branch
          %729 = sbr.rel (%p727) target = $region60
        $region59: #{tpu_custom_call.1} parent=43 // pred_region
          %731 = vsyncadd %s723, 0
          %s732 = smul.addr %s26, 8
          %s733 = scalar_lea.hbm %s6, %s732
          %s735 = sshll.u32 %s726, 4
          %s736 = int_to_ptr.vmem [resolvable:$true] %s735
          %s737 = sshll.u32 %s733, 4
          %s738 = int_to_ptr.hbm [resolvable:$true] %s737
          %740 = dma.vmem_to_hbm [thread:$0]  %s736, 128, %s738, %s723
        $region60: #{tpu_custom_call.1} parent=43 // pred_fallthru
          _
      $region44: #{tpu_custom_call.1} parent=5 // pred_fallthru
        _
      %p741 = scmp.le.s32.totalorder 2, %s21
      // Predicated region
      $region61: #{tpu_custom_call.1} parent=5 // pred_check
        %p742 = pneg %p741
      $region62: #{tpu_custom_call.1} parent=5 // pred_check_branch
        %744 = sbr.rel (%p742) target = $region64
      $region63: #{tpu_custom_call.1} parent=5 // pred_region
        %s745 = ssub.s32 %s21, 2
        // Predicated region
        $region65: #{tpu_custom_call.1} parent=63 // pred_check
          %p746 = pneg %p196
        $region66: #{tpu_custom_call.1} parent=63 // pred_check_branch
          %748 = sbr.rel (%p746) target = $region68
        $region67: #{tpu_custom_call.1} parent=63 // pred_region
          %s749 = sand.u32 %s181, 1
          %s750 = scalar_lea.sflag [#allocation4], %s749
          %s751 = sand.u32 %s181, 1
          %s752 = smul.addr %s751, 8
          %s753 = scalar_lea.vmem [#allocation8], %s752
          %755 = dma.done %s750, 128
        $region68: #{tpu_custom_call.1} parent=63 // pred_fallthru
          _
      $region64: #{tpu_custom_call.1} parent=5 // pred_fallthru
        _
    $region6: #{tpu_custom_call.1} parent=1 // loop_footer
      %s25 = sadd.s32 1, %s21
    $region7: #{tpu_custom_call.1} parent=1 // loop_footer_branch
      %20 = sbr.rel target = $region3
    $region8: #{tpu_custom_call.1} parent=1 // loop_exit
      _
    %756 = vsyncpa [#allocation3], 1
    %s757 = scalar_lea.sflag [#allocation3], 1
    %758 = vsyncpa %s757, 1
    %759 = vsyncpa [#allocation6], 1
    %s760 = scalar_lea.sflag [#allocation6], 1
    %761 = vsyncpa %s760, 1
    %762 = vsyncpa [#allocation4], 1
    %s763 = scalar_lea.sflag [#allocation4], 1
    %764 = vsyncpa %s763, 1

</llo_original>
